<compile_context>
chip_gen: v6e
topology: v6e:2x2x1
jax: 0.10.0
libtpu: 0.0.40
codegen_flags: <defaults>
</compile_context>

<pallas_src>
import functools

import jax
import jax.numpy as jnp
from jax.experimental import pallas as pl
from jax.experimental.pallas import tpu as pltpu

# ---------------- model dimensions (MLP path, small config) -----------------
N_INPUTS = 64     # n_inputs  (flattened input size)
N_HIDDEN = 32     # args.n_hiddens
N_LAYERS = 2      # args.n_layers -> Linear(64,32) ReLU Linear(32,32) ReLU Linear(32,16)
N_OUTPUTS = 16    # n_outputs
N_TASKS = 4
BATCH = 8

LANE = 128
SUBLANE = 8
SUB_TILE = 128        # in-kernel row sub-tile (bounds vreg pressure)
DEFAULT_TB_MAX = 512  # batch-tile cap: per-step overhead amortized, ~roofline DMA


def _round_up(n, m):
    return ((n + m - 1) // m) * m


def _choose_tb(batch, tb_max=DEFAULT_TB_MAX):
    """Batch-tile rows: >= 2 grid steps when the batch allows (v7x megacore),
    capped at tb_max, multiple of 8 (sublane); multiple of SUB_TILE once above
    it so the in-kernel 128-row sub-tiling divides evenly."""
    tb = _round_up(max(pl.cdiv(batch, 2), 1), SUBLANE)
    tb = min(tb, tb_max)
    if tb > SUB_TILE:
        tb = _round_up(tb, SUB_TILE)
    return tb


# ---------------------------- kernel bodies ---------------------------------
def _forward_tile(x, w1_ref, w2_ref, w3_ref, b_ref, off1, off2, *, hp, n_out):
    """rows x d_in -> rows x n_out.  MXU matmuls with f32 accumulation; bias
    add / ReLU / task mask stay in f32 (v5e VPU has no bf16)."""
    h = jnp.dot(x.astype(w1_ref.dtype), w1_ref[...],
                preferred_element_type=jnp.float32)
    h = jnp.maximum(h + b_ref[0, :hp], 0.0)
    h = jnp.dot(h.astype(w2_ref.dtype), w2_ref[...],
                preferred_element_type=jnp.float32)
    h = jnp.maximum(h + b_ref[1, :hp], 0.0)
    o = jnp.dot(h.astype(w3_ref.dtype), w3_ref[...],
                preferred_element_type=jnp.float32)
    o = o + b_ref[2, :n_out]
    if off1 is not None:
        # output[:, :offset1] = -1e11 ; output[:, offset2:] = -1e11
        col = jax.lax.broadcasted_iota(jnp.int32, o.shape, 1)
        o = jnp.where((col < off1) | (col >= off2),
                      jnp.float32(-100000000000.0), o)
    return o


def _forward_block(x_ref, w1_ref, w2_ref, w3_ref, b_ref, out_ref, off1, off2,
                   *, hp, n_out, sub):
    """Process one (tb, d_in) block; sub-tile rows when tb > sub so the f32
    intermediates stay bounded in vregs."""
    tb = x_ref.shape[0]
    if tb <= sub:
        out_ref[...] = _forward_tile(x_ref[...], w1_ref, w2_ref, w3_ref, b_ref,
                                     off1, off2, hp=hp, n_out=n_out)
    else:
        assert tb % sub == 0, (tb, sub)

        def body(j, carry):
            r = pl.multiple_of(j * sub, sub)
            out_ref[pl.ds(r, sub), :] = _forward_tile(
                x_ref[pl.ds(r, sub), :], w1_ref, w2_ref, w3_ref, b_ref,
                off1, off2, hp=hp, n_out=n_out)
            return carry

        jax.lax.fori_loop(0, tb // sub, body, 0, unroll=True)


def _kernel_plain(x_ref, w1_ref, w2_ref, w3_ref, b_ref, out_ref,
                  *, hp, n_out, sub):
    _forward_block(x_ref, w1_ref, w2_ref, w3_ref, b_ref, out_ref, None, None,
                   hp=hp, n_out=n_out, sub=sub)


def _kernel_masked(off_ref, x_ref, w1_ref, w2_ref, w3_ref, b_ref, out_ref,
                   *, hp, n_out, sub, task_from_grid):
    row = pl.program_id(0) if task_from_grid else 0
    _forward_block(x_ref, w1_ref, w2_ref, w3_ref, b_ref, out_ref,
                   off_ref[row, 0], off_ref[row, 1],
                   hp=hp, n_out=n_out, sub=sub)


# ---------------------------- parameter prep --------------------------------
def prepare_params(params, compute_dtype=jnp.bfloat16):
    """Pad hidden widths to 128 lanes (zero pad -> numerics unchanged), cast
    weights to the MXU compute dtype, keep W3 at its true output width, and
    pack the three biases into a single lane-dense (8, 128) f32 tile."""
    w1, b1, w2, b2, w3, b3 = params
    d_in, h = w1.shape
    n_out = w3.shape[1]
    hp = _round_up(h, LANE)

    w1p = jnp.zeros((d_in, hp), compute_dtype).at[:, :h].set(w1.astype(compute_dtype))
    w2p = jnp.zeros((hp, hp), compute_dtype).at[:h, :h].set(w2.astype(compute_dtype))
    w3p = jnp.zeros((hp, n_out), compute_dtype).at[:h, :].set(w3.astype(compute_dtype))

    bias = jnp.zeros((SUBLANE, hp), jnp.float32)
    bias = bias.at[0, :h].set(b1.reshape(-1).astype(jnp.float32))
    bias = bias.at[1, :h].set(b2.reshape(-1).astype(jnp.float32))
    bias = bias.at[2, :n_out].set(b3.reshape(-1).astype(jnp.float32))

    dims = dict(d_in=d_in, h=h, n_out=n_out, hp=hp)
    return (w1p, w2p, w3p, bias), dims


# ---------------------------- forward wrappers -------------------------------
def net_forward(x, t, padded_params, dims, *, is_cifar=False, nc_per_task=None,
                tb_max=DEFAULT_TB_MAX):
    """Equivalent of Net.forward(x, t) for the MLP configuration.
    Returns f32 [B, n_outputs].  padded_params/dims from prepare_params."""
    w1p, w2p, w3p, bias = padded_params
    d_in, hp, n_out = dims["d_in"], dims["hp"], dims["n_out"]
    if nc_per_task is None:
        nc_per_task = n_out

    B = x.shape[0]
    assert x.shape[1] == d_in
    tb = _choose_tb(B, tb_max)
    grid = (pl.cdiv(B, tb),)      # ragged last block: Pallas masks the writeback
    out_shape = jax.ShapeDtypeStruct((B, n_out), jnp.float32)

    if is_cifar:
        offsets = jnp.array([[t * nc_per_task, (t + 1) * nc_per_task]], jnp.int32)
        kernel = functools.partial(_kernel_masked, hp=hp, n_out=n_out,
                                   sub=SUB_TILE, task_from_grid=False)
        grid_spec = pltpu.PrefetchScalarGridSpec(
            num_scalar_prefetch=1,
            grid=grid,
            in_specs=[
                pl.BlockSpec((tb, d_in),    lambda i, off: (i, 0)),  # x (f32, cast in-kernel)
                pl.BlockSpec((d_in, hp),    lambda i, off: (0, 0)),  # W1 (lane-padded)
                pl.BlockSpec((hp, hp),      lambda i, off: (0, 0)),  # W2 (lane-padded)
                pl.BlockSpec((hp, n_out),   lambda i, off: (0, 0)),  # W3 (true width)
                pl.BlockSpec((SUBLANE, hp), lambda i, off: (0, 0)),  # packed biases
            ],
            out_specs=pl.BlockSpec((tb, n_out), lambda i, off: (i, 0)),
        )
        args = (offsets, x, w1p, w2p, w3p, bias)
    else:
        kernel = functools.partial(_kernel_plain, hp=hp, n_out=n_out, sub=SUB_TILE)
        grid_spec = pltpu.PrefetchScalarGridSpec(
            num_scalar_prefetch=0,
            grid=grid,
            in_specs=[
                pl.BlockSpec((tb, d_in),    lambda i: (i, 0)),
                pl.BlockSpec((d_in, hp),    lambda i: (0, 0)),
                pl.BlockSpec((hp, hp),      lambda i: (0, 0)),
                pl.BlockSpec((hp, n_out),   lambda i: (0, 0)),
                pl.BlockSpec((SUBLANE, hp), lambda i: (0, 0)),
            ],
            out_specs=pl.BlockSpec((tb, n_out), lambda i: (i, 0)),
        )
        args = (x, w1p, w2p, w3p, bias)

    return pl.pallas_call(
        kernel,
        out_shape=out_shape,
        grid_spec=grid_spec,
        compiler_params=pltpu.CompilerParams(
            dimension_semantics=("parallel",)),   # batch tiles shard across TCs (v7x)
    )(*args)


def net_forward_replay(xs, tasks, padded_params, dims, *, is_cifar=False,
                       nc_per_task=None, tb_max=DEFAULT_TB_MAX):
    """Batched equivalent of the per-task replay forwards inside Net.observe():
    ONE pallas_call over a leading 'parallel' task axis so the VMEM-resident
    weights and the launch/pipeline overhead are amortized across all tasks.

    xs: [T, M, n_inputs] (e.g. memory_data), tasks: [T] int32.
    Returns f32 [T, M, n_outputs] (per-task masked when is_cifar)."""
    w1p, w2p, w3p, bias = padded_params
    d_in, hp, n_out = dims["d_in"], dims["hp"], dims["n_out"]
    if nc_per_task is None:
        nc_per_task = n_out

    T, M, _ = xs.shape
    tasks = jnp.asarray(tasks, jnp.int32)
    if is_cifar:
        off1 = tasks * nc_per_task
        off2 = off1 + nc_per_task
    else:
        # forward() does not mask when not is_cifar -> make the mask a no-op
        off1 = jnp.zeros_like(tasks)
        off2 = jnp.full_like(tasks, n_out)
    offsets = jnp.stack([off1, off2], axis=1)          # (T, 2) -> SMEM prefetch

    tb = _choose_tb(M, tb_max)
    grid = (T, pl.cdiv(M, tb))

    kernel = functools.partial(_kernel_masked, hp=hp, n_out=n_out,
                               sub=SUB_TILE, task_from_grid=True)
    grid_spec = pltpu.PrefetchScalarGridSpec(
        num_scalar_prefetch=1,
        grid=grid,
        in_specs=[
            pl.BlockSpec((None, tb, d_in), lambda g, i, off: (g, i, 0)),
            pl.BlockSpec((d_in, hp),       lambda g, i, off: (0, 0)),
            pl.BlockSpec((hp, hp),         lambda g, i, off: (0, 0)),
            pl.BlockSpec((hp, n_out),      lambda g, i, off: (0, 0)),
            pl.BlockSpec((SUBLANE, hp),    lambda g, i, off: (0, 0)),
        ],
        out_specs=pl.BlockSpec((None, tb, n_out), lambda g, i, off: (g, i, 0)),
    )
    return pl.pallas_call(
        kernel,
        out_shape=jax.ShapeDtypeStruct((T, M, n_out), jnp.float32),
        grid_spec=grid_spec,
        compiler_params=pltpu.CompilerParams(
            dimension_semantics=("parallel", "parallel")),
    )(offsets, xs, w1p, w2p, w3p, bias)


# ---------------------------- init & reference ------------------------------
def init_params(key):
    """Deterministic init matching nn.Linear's U(-1/sqrt(fan_in), 1/sqrt(fan_in))."""
    sizes = [N_INPUTS] + [N_HIDDEN] * N_LAYERS + [N_OUTPUTS]
    params = []
    for i in range(len(sizes) - 1):
        fan_in, fan_out = sizes[i], sizes[i + 1]
        key, kw, kb = jax.random.split(key, 3)
        bound = 1.0 / (fan_in ** 0.5)
        # stored as [in, out] so the kernel does x @ W
        w = jax.random.uniform(kw, (fan_in, fan_out), jnp.float32, -bound, bound)
        b = jax.random.uniform(kb, (1, fan_out), jnp.float32, -bound, bound)
        params += [w, b]
    return tuple(params)


def _reference_forward(x, params, t=0, is_cifar=False, nc_per_task=N_OUTPUTS,
                       n_outputs=N_OUTPUTS):
    w1, b1, w2, b2, w3, b3 = params
    h = jnp.maximum(x @ w1 + b1, 0.0)
    h = jnp.maximum(h @ w2 + b2, 0.0)
    o = h @ w3 + b3
    if is_cifar:
        off1, off2 = t * nc_per_task, (t + 1) * nc_per_task
        col = jnp.arange(n_outputs)
        o = jnp.where((col < off1) | (col >= off2), -100000000000.0, o)
    return o


# --------------------------------- main --------------------------------------
if __name__ == "__main__":
    key = jax.random.PRNGKey(0)
    key, kx, kx2, kx3, km = jax.random.split(key, 5)
    params = init_params(key)

    # --- tiny batch (B=8), full-f32 path: exact check vs. reference ----------
    x_small = jax.random.normal(kx, (BATCH, N_INPUTS), jnp.float32)
    pp_f32, dims_f32 = prepare_params(params, compute_dtype=jnp.float32)
    out = jax.block_until_ready(net_forward(x_small, 0, pp_f32, dims_f32))
    ref = _reference_forward(x_small, params)
    assert out.shape == (BATCH, N_OUTPUTS)
    assert jnp.allclose(out, ref, atol=1e-5, rtol=1e-5)

    # --- bf16 production path, B=256 -> tb=128, 2 parallel grid steps --------
    pp_bf16, dims_bf16 = prepare_params(params, compute_dtype=jnp.bfloat16)
    x_mid = jax.random.normal(kx2, (256, N_INPUTS), jnp.float32)
    out_mid = jax.block_until_ready(net_forward(x_mid, 0, pp_bf16, dims_bf16))
    ref_mid = _reference_forward(x_mid, params)
    assert out_mid.shape == (256, N_OUTPUTS)
    assert jnp.allclose(out_mid, ref_mid, atol=5e-2, rtol=5e-2)

    # --- large ragged batch, B=2000 -> tb=512, 4 steps, in-kernel sub-tiling --
    x_big = jax.random.normal(kx3, (2000, N_INPUTS), jnp.float32)
    out_big = jax.block_until_ready(net_forward(x_big, 0, pp_bf16, dims_bf16))
    ref_big = _reference_forward(x_big, params)
    assert out_big.shape == (2000, N_OUTPUTS)
    assert jnp.allclose(out_big, ref_big, atol=5e-2, rtol=5e-2)

    # --- task-masked variant (forward's is_cifar branch), scalar prefetch ----
    nc = N_OUTPUTS // N_TASKS
    t = 2
    out_c = jax.block_until_ready(
        net_forward(x_small, t, pp_f32, dims_f32, is_cifar=True, nc_per_task=nc))
    ref_c = _reference_forward(x_small, params, t=t, is_cifar=True, nc_per_task=nc)
    assert jnp.allclose(out_c, ref_c, atol=1e-5, rtol=1e-5)

    # --- replay amortization: all tasks' memory buffers in ONE pallas_call ---
    T, M = N_TASKS, 16
    mem = jax.random.normal(km, (T, M, N_INPUTS), jnp.float32)  # memory_data
    tasks = jnp.arange(T, dtype=jnp.int32)
    out_r = jax.block_until_ready(
        net_forward_replay(mem, tasks, pp_f32, dims_f32,
                           is_cifar=True, nc_per_task=nc))
    assert out_r.shape == (T, M, N_OUTPUTS)
    for tt in range(T):
        ref_t = _reference_forward(mem[tt], params, t=tt, is_cifar=True,
                                   nc_per_task=nc)
        assert jnp.allclose(out_r[tt], ref_t, atol=1e-5, rtol=1e-5)

    # TODO(synk): observe() (cross-entropy backward, SGD step, GEM/AGEM
    # gradient projection via quadprog, episodic-memory writes) is host-side
    # training logic, not part of the forward pass; it is intentionally not a
    # Pallas kernel here.
    print("KERNEL_OK")
</pallas_src>

<mosaic_0001>
module attributes {stable_mosaic.version = 11 : i64} {
  func.func @_kernel_plain(%arg0: i32, %arg1: memref<8x64xf32, #tpu.memory_space<vmem>>, %arg2: memref<64x128xf32, #tpu.memory_space<vmem>>, %arg3: memref<128x128xf32, #tpu.memory_space<vmem>>, %arg4: memref<128x16xf32, #tpu.memory_space<vmem>>, %arg5: memref<8x128xf32, #tpu.memory_space<vmem>>, %arg6: memref<8x16xf32, #tpu.memory_space<vmem>>) attributes {dimension_semantics = [#tpu.dimension_semantics<parallel>], iteration_bounds = array<i64: 1>, scalar_prefetch = 0 : i64, scratch_operands = 0 : i64, tpu.core_type = #tpu.core_type<tc>, window_params = [{transform_indices = @transform_0, window_bounds = array<i64: 8, 64>}, {pipeline_mode = #tpu.pipeline_mode<synchronous>, transform_indices = @transform_1, window_bounds = array<i64: 64, 128>}, {pipeline_mode = #tpu.pipeline_mode<synchronous>, transform_indices = @transform_2, window_bounds = array<i64: 128, 128>}, {pipeline_mode = #tpu.pipeline_mode<synchronous>, transform_indices = @transform_3, window_bounds = array<i64: 128, 16>}, {pipeline_mode = #tpu.pipeline_mode<synchronous>, transform_indices = @transform_4, window_bounds = array<i64: 8, 128>}, {transform_indices = @transform_5, window_bounds = array<i64: 8, 16>}]} {
    %c0 = arith.constant 0 : index
    %c0_0 = arith.constant 0 : index
    %0 = vector.load %arg1[%c0, %c0_0] : memref<8x64xf32, #tpu.memory_space<vmem>>, vector<8x64xf32>
    %c0_1 = arith.constant 0 : index
    %c0_2 = arith.constant 0 : index
    %1 = vector.load %arg2[%c0_1, %c0_2] : memref<64x128xf32, #tpu.memory_space<vmem>>, vector<64x128xf32>
    %cst = arith.constant dense<0.000000e+00> : vector<8x128xf32>
    %2 = tpu.matmul %0, %1, %cst {dimension_numbers = #tpu.dot_dimension_numbers<[1], [0], [0], [1], [0, 0, 1, 1], [], []>} : vector<8x64xf32>, vector<64x128xf32>, vector<8x128xf32> -> vector<8x128xf32>
    %c0_3 = arith.constant 0 : index
    %c0_4 = arith.constant 0 : index
    %3 = vector.load %arg5[%c0_3, %c0_4] : memref<8x128xf32, #tpu.memory_space<vmem>>, vector<1x128xf32>
    %4 = vector.shape_cast %3 : vector<1x128xf32> to vector<128xf32>
    %5 = vector.shape_cast %4 : vector<128xf32> to vector<1x128xf32>
    %6 = vector.broadcast %5 : vector<1x128xf32> to vector<8x128xf32>
    %7 = arith.addf %2, %6 : vector<8x128xf32>
    %cst_5 = arith.constant 0.000000e+00 : f32
    %8 = vector.broadcast %cst_5 : f32 to vector<8x128xf32>
    %9 = arith.maximumf %7, %8 : vector<8x128xf32>
    %c0_6 = arith.constant 0 : index
    %c0_7 = arith.constant 0 : index
    %10 = vector.load %arg3[%c0_6, %c0_7] : memref<128x128xf32, #tpu.memory_space<vmem>>, vector<128x128xf32>
    %cst_8 = arith.constant dense<0.000000e+00> : vector<8x128xf32>
    %11 = tpu.matmul %9, %10, %cst_8 {dimension_numbers = #tpu.dot_dimension_numbers<[1], [0], [0], [1], [0, 0, 1, 1], [], []>} : vector<8x128xf32>, vector<128x128xf32>, vector<8x128xf32> -> vector<8x128xf32>
    %c1 = arith.constant 1 : index
    %c0_9 = arith.constant 0 : index
    %12 = vector.load %arg5[%c1, %c0_9] : memref<8x128xf32, #tpu.memory_space<vmem>>, vector<1x128xf32>
    %13 = vector.shape_cast %12 : vector<1x128xf32> to vector<128xf32>
    %14 = vector.shape_cast %13 : vector<128xf32> to vector<1x128xf32>
    %15 = vector.broadcast %14 : vector<1x128xf32> to vector<8x128xf32>
    %16 = arith.addf %11, %15 : vector<8x128xf32>
    %cst_10 = arith.constant 0.000000e+00 : f32
    %17 = vector.broadcast %cst_10 : f32 to vector<8x128xf32>
    %18 = arith.maximumf %16, %17 : vector<8x128xf32>
    %c0_11 = arith.constant 0 : index
    %c0_12 = arith.constant 0 : index
    %19 = vector.load %arg4[%c0_11, %c0_12] : memref<128x16xf32, #tpu.memory_space<vmem>>, vector<128x16xf32>
    %cst_13 = arith.constant dense<0.000000e+00> : vector<8x16xf32>
    %20 = tpu.matmul %18, %19, %cst_13 {dimension_numbers = #tpu.dot_dimension_numbers<[1], [0], [0], [1], [0, 0, 1, 1], [], []>} : vector<8x128xf32>, vector<128x16xf32>, vector<8x16xf32> -> vector<8x16xf32>
    %c2 = arith.constant 2 : index
    %c0_14 = arith.constant 0 : index
    %21 = vector.load %arg5[%c2, %c0_14] : memref<8x128xf32, #tpu.memory_space<vmem>>, vector<1x16xf32>
    %22 = vector.shape_cast %21 : vector<1x16xf32> to vector<16xf32>
    %23 = vector.shape_cast %22 : vector<16xf32> to vector<1x16xf32>
    %24 = vector.broadcast %23 : vector<1x16xf32> to vector<8x16xf32>
    %25 = arith.addf %20, %24 : vector<8x16xf32>
    %c0_15 = arith.constant 0 : index
    %c0_16 = arith.constant 0 : index
    %26 = vector.load %arg6[%c0_15, %c0_16] : memref<8x16xf32, #tpu.memory_space<vmem>>, vector<8x16xf32>
    tpu.vector_store %arg6[%c0_15, %c0_16], %25 {strides = array<i32>} : memref<8x16xf32, #tpu.memory_space<vmem>>, vector<8x16xf32>,
    return
  }
  func.func @transform_0(%arg0: i32) -> (i32, i32) {
    %c0_i32 = arith.constant 0 : i32
    %c0_i32_0 = arith.constant 0 : i32
    return %arg0, %c0_i32 : i32, i32
  }
  func.func @transform_1(%arg0: i32) -> (i32, i32) {
    %c0_i32 = arith.constant 0 : i32
    %c0_i32_0 = arith.constant 0 : i32
    %c0_i32_1 = arith.constant 0 : i32
    return %c0_i32, %c0_i32_0 : i32, i32
  }
  func.func @transform_2(%arg0: i32) -> (i32, i32) {
    %c0_i32 = arith.constant 0 : i32
    %c0_i32_0 = arith.constant 0 : i32
    %c0_i32_1 = arith.constant 0 : i32
    return %c0_i32, %c0_i32_0 : i32, i32
  }
  func.func @transform_3(%arg0: i32) -> (i32, i32) {
    %c0_i32 = arith.constant 0 : i32
    %c0_i32_0 = arith.constant 0 : i32
    %c0_i32_1 = arith.constant 0 : i32
    return %c0_i32, %c0_i32_0 : i32, i32
  }
  func.func @transform_4(%arg0: i32) -> (i32, i32) {
    %c0_i32 = arith.constant 0 : i32
    %c0_i32_0 = arith.constant 0 : i32
    %c0_i32_1 = arith.constant 0 : i32
    return %c0_i32, %c0_i32_0 : i32, i32
  }
  func.func @transform_5(%arg0: i32) -> (i32, i32) {
    %c0_i32 = arith.constant 0 : i32
    %c0_i32_0 = arith.constant 0 : i32
    return %arg0, %c0_i32 : i32, i32
  }
}

</mosaic_0001>

<llo_original>
// kernel: tpu_custom_call.1
$region0: #{tpu_custom_call.1}
  #allocation0 [shape = 'u32[]', space=smem, size = 0x4, offset = 0x4, fixed_abs, tag = 'smem constant byte address 0x4 - core index']
  #allocation1 [shape = 'u32[144,128]{1,0:T(1,128)}', space=vmem, size = 0x12000, scoped, tag = 'internal scratch']
  %s0 = inlined_call_operand.vmem [shape: f32[8,64], index: 0, kind: input, shape index: {}]
  %s1 = inlined_call_operand.hbm [shape: f32[64,128], index: 1, kind: input, shape index: {}]
  %s2 = inlined_call_operand.vmem [shape: f32[128,128], index: 2, kind: input, shape index: {}]
  %s3 = inlined_call_operand.vmem [shape: f32[128,16], index: 3, kind: input, shape index: {}]
  %s4 = inlined_call_operand.vmem [shape: f32[8,128], index: 4, kind: input, shape index: {}]
  %s5 = inlined_call_operand.hbm [shape: f32[8,16], index: 5, kind: output, shape index: {}]
  %s6 = sld [smem:[#allocation0]]
  $region34: #{tpu_custom_call.1} parent=0
    _
  %s8 = ssub.s32 1, %s6
  %s9 = scalar_select 0, %s8, %s6
  $region1: #{tpu_custom_call.1} parent=0
    #allocation2 [shape = 'u8[32768]{0}', space=vmem, size = 0x8000, scoped, tag = 'input window, operand 1, single buffered']
    #allocation3 [shape = 's32[1]{0}', space=sflag, size = 0x4, scoped, tag = 'scoped memory for tpu_custom_call.1']
    #allocation4 [shape = 's32[1]{0}', space=sflag, size = 0x4, scoped, tag = 'scoped memory for tpu_custom_call.1']
    #allocation5 [shape = 'u8[4096]{0}', space=vmem, size = 0x1000, scoped, tag = 'output window, operand 0, single buffered']
    %10 = vsyncpa [#allocation3], 0
    %11 = vsyncpa [#allocation4], 0
    // Predicated region
    $region2: #{tpu_custom_call.1} parent=1 // pred_check
      _
    $region3: #{tpu_custom_call.1} parent=1 // pred_check_branch
      %13 = sbr.rel (0) target = $region5
    $region4: #{tpu_custom_call.1} parent=1 // pred_region
      _
    $region5: #{tpu_custom_call.1} parent=1 // pred_fallthru
      _
    // Predicated region
    $region6: #{tpu_custom_call.1} parent=1 // pred_check
      _
    $region7: #{tpu_custom_call.1} parent=1 // pred_check_branch
      %15 = sbr.rel (0) target = $region9
    $region8: #{tpu_custom_call.1} parent=1 // pred_region
      %s17 = ssub.s32 1024, 1024
      %18 = vsyncadd [#allocation3], %s17
      %s19 = sshll.u32 [#allocation2], 4
      %s20 = int_to_ptr.vmem [resolvable:$true] %s19
      %25 = dma.hbm_to_vmem [thread:$0]  %s1, 1024, %s20, [#allocation3], 128, 128, 8
    $region9: #{tpu_custom_call.1} parent=1 // pred_fallthru
      _
    // Predicated region
    $region10: #{tpu_custom_call.1} parent=1 // pred_check
      _
    $region11: #{tpu_custom_call.1} parent=1 // pred_check_branch
      %27 = sbr.rel (0) target = $region13
    $region12: #{tpu_custom_call.1} parent=1 // pred_region
      _
    $region13: #{tpu_custom_call.1} parent=1 // pred_fallthru
      _
    // Predicated region
    $region14: #{tpu_custom_call.1} parent=1 // pred_check
      _
    $region15: #{tpu_custom_call.1} parent=1 // pred_check_branch
      %29 = sbr.rel (0) target = $region17
    $region16: #{tpu_custom_call.1} parent=1 // pred_region
      _
    $region17: #{tpu_custom_call.1} parent=1 // pred_fallthru
      _
    // Predicated region
    $region18: #{tpu_custom_call.1} parent=1 // pred_check
      _
    $region19: #{tpu_custom_call.1} parent=1 // pred_check_branch
      %31 = sbr.rel (0) target = $region21
    $region20: #{tpu_custom_call.1} parent=1 // pred_region
      _
    $region21: #{tpu_custom_call.1} parent=1 // pred_fallthru
      _
    // Predicated region
    $region22: #{tpu_custom_call.1} parent=1 // pred_check
      _
    $region23: #{tpu_custom_call.1} parent=1 // pred_check_branch
      %33 = sbr.rel (0) target = $region25
    $region24: #{tpu_custom_call.1} parent=1 // pred_region
      %34 = dma.done [#allocation3], 1024
    $region25: #{tpu_custom_call.1} parent=1 // pred_fallthru
      _
    %v35 = vld [vmem:[%s0] sm:$0xff]
    %v36 = vld [vmem:[#allocation2] sm:$0xff]
    %v37 = vld [vmem:[#allocation2 + $0x8] sm:$0xff]
    %v38 = vld [vmem:[#allocation2 + $0x10] sm:$0xff]
    %v39 = vld [vmem:[#allocation2 + $0x18] sm:$0xff]
    %v40 = vld [vmem:[#allocation2 + $0x20] sm:$0xff]
    %v41 = vld [vmem:[#allocation2 + $0x28] sm:$0xff]
    %v42 = vld [vmem:[#allocation2 + $0x30] sm:$0xff]
    %v43 = vld [vmem:[#allocation2 + $0x38] sm:$0xff]
    %v44 = vld [vmem:[%s4] sm:$0x1]
    %v45 = vlaneseq
    %v46 = vshrl.u32 %v45, 7
    %v47 = vsub.s32 0, %v46
    %v48 = vrot.slane %v44, %v47
    %vm49 = vcmask 523264
    %v51 = vsel %vm49, %v35, 0
    %53 = vmatprep.subr.mxu0 0.0
    %54 = vmatpush1.msra.mxu0 0.0
    %55 = vmatprep.subr.mxu0 0.0
    %56 = vmatpush1.msra.mxu0 0.0
    %57 = vmatprep.subr.mxu0 0.0
    %58 = vmatpush1.msra.mxu0 0.0
    %59 = vmatprep.subr.mxu0 0.0
    %60 = vmatpush1.msra.mxu0 0.0
    %61 = vmatprep.subr.mxu0 0.0
    %62 = vmatpush1.msra.mxu0 0.0
    %63 = vmatprep.subr.mxu0 0.0
    %64 = vmatpush1.msra.mxu0 0.0
    %65 = vmatprep.subr.mxu0 0.0
    %66 = vmatpush1.msra.mxu0 0.0
    %67 = vmatprep.subr.mxu0 0.0
    %68 = vmatpush1.msra.mxu0 0.0
    %69 = vmatprep.subr.mxu0 0.0
    %70 = vmatpush1.msra.mxu0 %v43
    %71 = vmatprep.subr.mxu0 0.0
    %72 = vmatpush1.msra.mxu0 %v42
    %73 = vmatprep.subr.mxu0 0.0
    %74 = vmatpush1.msra.mxu0 %v41
    %75 = vmatprep.subr.mxu0 0.0
    %76 = vmatpush1.msra.mxu0 %v40
    %77 = vmatprep.subr.mxu0 0.0
    %78 = vmatpush1.msra.mxu0 %v39
    %79 = vmatprep.subr.mxu0 0.0
    %80 = vmatpush1.msra.mxu0 %v38
    %81 = vmatprep.subr.mxu0 0.0
    %82 = vmatpush1.msra.mxu0 %v37
    %83 = vmatprep.subr.mxu0 0.0
    %84 = vmatpush1.msra.mxu0 %v36
    %85 = vmatprep.subr.mxu0 0.0
    %86 = vmatpush2.msra.mxu0 0.0
    %87 = vmatprep.subr.mxu0 0.0
    %88 = vmatpush2.msra.mxu0 0.0
    %89 = vmatprep.subr.mxu0 0.0
    %90 = vmatpush2.msra.mxu0 0.0
    %91 = vmatprep.subr.mxu0 0.0
    %92 = vmatpush2.msra.mxu0 0.0
    %93 = vmatprep.subr.mxu0 0.0
    %94 = vmatpush2.msra.mxu0 0.0
    %95 = vmatprep.subr.mxu0 0.0
    %96 = vmatpush2.msra.mxu0 0.0
    %97 = vmatprep.subr.mxu0 0.0
    %98 = vmatpush2.msra.mxu0 0.0
    %99 = vmatprep.subr.mxu0 0.0
    %100 = vmatpush2.msra.mxu0 0.0
    %101 = vmatprep.subr.mxu0 0.0
    %102 = vmatpush2.msra.mxu0 0.0
    %103 = vmatprep.subr.mxu0 0.0
    %104 = vmatpush2.msra.mxu0 0.0
    %105 = vmatprep.subr.mxu0 0.0
    %106 = vmatpush2.msra.mxu0 0.0
    %107 = vmatprep.subr.mxu0 0.0
    %108 = vmatpush2.msra.mxu0 0.0
    %109 = vmatprep.subr.mxu0 0.0
    %110 = vmatpush2.msra.mxu0 0.0
    %111 = vmatprep.subr.mxu0 0.0
    %112 = vmatpush2.msra.mxu0 0.0
    %113 = vmatprep.subr.mxu0 0.0
    %114 = vmatpush2.msra.mxu0 0.0
    %115 = vmatprep.subr.mxu0 0.0
    %116 = vmatpush2.msra.mxu0 0.0
    %117 = vmatprep.mubr.f32.mxu0 0.0
    %118 = vmatmul.mubr.f32.gmra.mxu0 %v51
    %v119 = vpop.f32.mrf.mxu0
    %v120 = vadd.f32 %v48, %v119
    %v121 = vpop.f32.mrf.mxu0
    %122 = vdwg.mxu0
    %v123 = vmax.f32 %v120, 0.0
    %v124 = vld [vmem:[%s2] sm:$0xff]
    %v125 = vld [vmem:[%s2 + $0x8] sm:$0xff]
    %v126 = vld [vmem:[%s2 + $0x10] sm:$0xff]
    %v127 = vld [vmem:[%s2 + $0x18] sm:$0xff]
    %v128 = vld [vmem:[%s2 + $0x20] sm:$0xff]
    %v129 = vld [vmem:[%s2 + $0x28] sm:$0xff]
    %v130 = vld [vmem:[%s2 + $0x30] sm:$0xff]
    %v131 = vld [vmem:[%s2 + $0x38] sm:$0xff]
    %v132 = vld [vmem:[%s2 + $0x40] sm:$0xff]
    %v133 = vld [vmem:[%s2 + $0x48] sm:$0xff]
    %v134 = vld [vmem:[%s2 + $0x50] sm:$0xff]
    %v135 = vld [vmem:[%s2 + $0x58] sm:$0xff]
    %v136 = vld [vmem:[%s2 + $0x60] sm:$0xff]
    %v137 = vld [vmem:[%s2 + $0x68] sm:$0xff]
    %v138 = vld [vmem:[%s2 + $0x70] sm:$0xff]
    %v139 = vld [vmem:[%s2 + $0x78] sm:$0xff]
    %v140 = vld [vmem:[%s4 + $0x1] sm:$0x1]
    %v141 = vlaneseq
    %v142 = vshrl.u32 %v141, 7
    %v143 = vsub.s32 0, %v142
    %v144 = vrot.slane %v140, %v143
    %145 = vmatprep.subr.mxu0 0.0
    %146 = vmatpush1.msra.mxu0 %v139
    %147 = vmatprep.subr.mxu0 0.0
    %148 = vmatpush1.msra.mxu0 %v138
    %149 = vmatprep.subr.mxu0 0.0
    %150 = vmatpush1.msra.mxu0 %v137
    %151 = vmatprep.subr.mxu0 0.0
    %152 = vmatpush1.msra.mxu0 %v136
    %153 = vmatprep.subr.mxu0 0.0
    %154 = vmatpush1.msra.mxu0 %v135
    %155 = vmatprep.subr.mxu0 0.0
    %156 = vmatpush1.msra.mxu0 %v134
    %157 = vmatprep.subr.mxu0 0.0
    %158 = vmatpush1.msra.mxu0 %v133
    %159 = vmatprep.subr.mxu0 0.0
    %160 = vmatpush1.msra.mxu0 %v132
    %161 = vmatprep.subr.mxu0 0.0
    %162 = vmatpush1.msra.mxu0 %v131
    %163 = vmatprep.subr.mxu0 0.0
    %164 = vmatpush1.msra.mxu0 %v130
    %165 = vmatprep.subr.mxu0 0.0
    %166 = vmatpush1.msra.mxu0 %v129
    %167 = vmatprep.subr.mxu0 0.0
    %168 = vmatpush1.msra.mxu0 %v128
    %169 = vmatprep.subr.mxu0 0.0
    %170 = vmatpush1.msra.mxu0 %v127
    %171 = vmatprep.subr.mxu0 0.0
    %172 = vmatpush1.msra.mxu0 %v126
    %173 = vmatprep.subr.mxu0 0.0
    %174 = vmatpush1.msra.mxu0 %v125
    %175 = vmatprep.subr.mxu0 0.0
    %176 = vmatpush1.msra.mxu0 %v124
    %177 = vmatprep.subr.mxu0 0.0
    %178 = vmatpush2.msra.mxu0 0.0
    %179 = vmatprep.subr.mxu0 0.0
    %180 = vmatpush2.msra.mxu0 0.0
    %181 = vmatprep.subr.mxu0 0.0
    %182 = vmatpush2.msra.mxu0 0.0
    %183 = vmatprep.subr.mxu0 0.0
    %184 = vmatpush2.msra.mxu0 0.0
    %185 = vmatprep.subr.mxu0 0.0
    %186 = vmatpush2.msra.mxu0 0.0
    %187 = vmatprep.subr.mxu0 0.0
    %188 = vmatpush2.msra.mxu0 0.0
    %189 = vmatprep.subr.mxu0 0.0
    %190 = vmatpush2.msra.mxu0 0.0
    %191 = vmatprep.subr.mxu0 0.0
    %192 = vmatpush2.msra.mxu0 0.0
    %193 = vmatprep.subr.mxu0 0.0
    %194 = vmatpush2.msra.mxu0 0.0
    %195 = vmatprep.subr.mxu0 0.0
    %196 = vmatpush2.msra.mxu0 0.0
    %197 = vmatprep.subr.mxu0 0.0
    %198 = vmatpush2.msra.mxu0 0.0
    %199 = vmatprep.subr.mxu0 0.0
    %200 = vmatpush2.msra.mxu0 0.0
    %201 = vmatprep.subr.mxu0 0.0
    %202 = vmatpush2.msra.mxu0 0.0
    %203 = vmatprep.subr.mxu0 0.0
    %204 = vmatpush2.msra.mxu0 0.0
    %205 = vmatprep.subr.mxu0 0.0
    %206 = vmatpush2.msra.mxu0 0.0
    %207 = vmatprep.subr.mxu0 0.0
    %208 = vmatpush2.msra.mxu0 0.0
    %209 = vmatprep.mubr.f32.mxu0 0.0
    %210 = vmatmul.mubr.f32.gmra.mxu0 %v123
    %v211 = vpop.f32.mrf.mxu0
    %v212 = vadd.f32 %v144, %v211
    %v213 = vpop.f32.mrf.mxu0
    %214 = vdwg.mxu0
    %v215 = vmax.f32 %v212, 0.0
    %v216 = vld [vmem:[%s3] sm:$0xff]
    %v217 = vld [vmem:[%s3 + $0x8] sm:$0xff]
    %v218 = vld [vmem:[%s3 + $0x10] sm:$0xff]
    %v219 = vld [vmem:[%s3 + $0x18] sm:$0xff]
    %v220 = vld [vmem:[%s3 + $0x20] sm:$0xff]
    %v221 = vld [vmem:[%s3 + $0x28] sm:$0xff]
    %v222 = vld [vmem:[%s3 + $0x30] sm:$0xff]
    %v223 = vld [vmem:[%s3 + $0x38] sm:$0xff]
    %v224 = vld [vmem:[%s3 + $0x40] sm:$0xff]
    %v225 = vld [vmem:[%s3 + $0x48] sm:$0xff]
    %v226 = vld [vmem:[%s3 + $0x50] sm:$0xff]
    %v227 = vld [vmem:[%s3 + $0x58] sm:$0xff]
    %v228 = vld [vmem:[%s3 + $0x60] sm:$0xff]
    %v229 = vld [vmem:[%s3 + $0x68] sm:$0xff]
    %v230 = vld [vmem:[%s3 + $0x70] sm:$0xff]
    %v231 = vld [vmem:[%s3 + $0x78] sm:$0xff]
    %v232 = vld [vmem:[%s4 + $0x2] sm:$0x1]
    %v233 = vlaneseq
    %v234 = vshrl.u32 %v233, 7
    %v235 = vsub.s32 0, %v234
    %v236 = vrot.slane %v232, %v235
    %237 = vmatprep.subr.mxu0 0.0
    %238 = vmatpush1.msra.mxu0 %v231
    %239 = vmatprep.subr.mxu0 0.0
    %240 = vmatpush1.msra.mxu0 %v230
    %241 = vmatprep.subr.mxu0 0.0
    %242 = vmatpush1.msra.mxu0 %v229
    %243 = vmatprep.subr.mxu0 0.0
    %244 = vmatpush1.msra.mxu0 %v228
    %245 = vmatprep.subr.mxu0 0.0
    %246 = vmatpush1.msra.mxu0 %v227
    %247 = vmatprep.subr.mxu0 0.0
    %248 = vmatpush1.msra.mxu0 %v226
    %249 = vmatprep.subr.mxu0 0.0
    %250 = vmatpush1.msra.mxu0 %v225
    %251 = vmatprep.subr.mxu0 0.0
    %252 = vmatpush1.msra.mxu0 %v224
    %253 = vmatprep.subr.mxu0 0.0
    %254 = vmatpush1.msra.mxu0 %v223
    %255 = vmatprep.subr.mxu0 0.0
    %256 = vmatpush1.msra.mxu0 %v222
    %257 = vmatprep.subr.mxu0 0.0
    %258 = vmatpush1.msra.mxu0 %v221
    %259 = vmatprep.subr.mxu0 0.0
    %260 = vmatpush1.msra.mxu0 %v220
    %261 = vmatprep.subr.mxu0 0.0
    %262 = vmatpush1.msra.mxu0 %v219
    %263 = vmatprep.subr.mxu0 0.0
    %264 = vmatpush1.msra.mxu0 %v218
    %265 = vmatprep.subr.mxu0 0.0
    %266 = vmatpush1.msra.mxu0 %v217
    %267 = vmatprep.subr.mxu0 0.0
    %268 = vmatpush1.msra.mxu0 %v216
    %269 = vmatprep.subr.mxu0 0.0
    %270 = vmatpush2.msra.mxu0 0.0
    %271 = vmatprep.subr.mxu0 0.0
    %272 = vmatpush2.msra.mxu0 0.0
    %273 = vmatprep.subr.mxu0 0.0
    %274 = vmatpush2.msra.mxu0 0.0
    %275 = vmatprep.subr.mxu0 0.0
    %276 = vmatpush2.msra.mxu0 0.0
    %277 = vmatprep.subr.mxu0 0.0
    %278 = vmatpush2.msra.mxu0 0.0
    %279 = vmatprep.subr.mxu0 0.0
    %280 = vmatpush2.msra.mxu0 0.0
    %281 = vmatprep.subr.mxu0 0.0
    %282 = vmatpush2.msra.mxu0 0.0
    %283 = vmatprep.subr.mxu0 0.0
    %284 = vmatpush2.msra.mxu0 0.0
    %285 = vmatprep.subr.mxu0 0.0
    %286 = vmatpush2.msra.mxu0 0.0
    %287 = vmatprep.subr.mxu0 0.0
    %288 = vmatpush2.msra.mxu0 0.0
    %289 = vmatprep.subr.mxu0 0.0
    %290 = vmatpush2.msra.mxu0 0.0
    %291 = vmatprep.subr.mxu0 0.0
    %292 = vmatpush2.msra.mxu0 0.0
    %293 = vmatprep.subr.mxu0 0.0
    %294 = vmatpush2.msra.mxu0 0.0
    %295 = vmatprep.subr.mxu0 0.0
    %296 = vmatpush2.msra.mxu0 0.0
    %297 = vmatprep.subr.mxu0 0.0
    %298 = vmatpush2.msra.mxu0 0.0
    %299 = vmatprep.subr.mxu0 0.0
    %300 = vmatpush2.msra.mxu0 0.0
    %301 = vmatprep.mubr.f32.mxu0 0.0
    %302 = vmatmul.mubr.f32.gmra.mxu0 %v215
    %v303 = vpop.f32.mrf.mxu0
    %v304 = vadd.f32 %v236, %v303
    %v305 = vpop.f32.mrf.mxu0
    %306 = vdwg.mxu0
    %vm307 = vcmask 130048
    %308 = vst.msk [vmem:[#allocation5] sm:$0xff] %vm307, %v304
    // Predicated region
    $region26: #{tpu_custom_call.1} parent=1 // pred_check
      _
    $region27: #{tpu_custom_call.1} parent=1 // pred_check_branch
      %310 = sbr.rel (0) target = $region29
    $region28: #{tpu_custom_call.1} parent=1 // pred_region
      %s312 = ssub.s32 128, 128
      %313 = vsyncadd [#allocation4], %s312
      %s315 = sshll.u32 [#allocation5], 4
      %s316 = int_to_ptr.vmem [resolvable:$true] %s315
      %318 = dma.vmem_to_hbm [thread:$0]  %s316, 128, %s5, [#allocation4]
    $region29: #{tpu_custom_call.1} parent=1 // pred_fallthru
      _
    // Predicated region
    $region30: #{tpu_custom_call.1} parent=1 // pred_check
      _
    $region31: #{tpu_custom_call.1} parent=1 // pred_check_branch
      %320 = sbr.rel (0) target = $region33
    $region32: #{tpu_custom_call.1} parent=1 // pred_region
      %321 = dma.done [#allocation4], 128
    $region33: #{tpu_custom_call.1} parent=1 // pred_fallthru
      _
    %322 = vsyncpa [#allocation3], 1
    %323 = vsyncpa [#allocation4], 1

</llo_original>
